<compile_context>
chip_gen: v7x
topology: tpu7x:2x2x1
jax: 0.10.0
libtpu: 0.0.40
codegen_flags: <defaults>
</compile_context>

<pallas_src>
import math
import functools

import jax
import jax.numpy as jnp
from jax.experimental import pallas as pl
from jax.experimental.pallas import tpu as pltpu


def _make_mha_kernel(num_heads: int, head_size: int, return_attn_maps: bool):
    H, hs = num_heads, head_size
    HS = H * hs

    def kernel(x_ref, wqkv_ref, wp_ref, bp_ref, *rest):
        if return_attn_maps:
            o_ref, attn_ref, heads_ref = rest
        else:
            o_ref, heads_ref = rest
        Bb, T, C = x_ref.shape

        # ---- fused Q/K/V projection: one wide bf16 MXU matmul, f32 accumulation ----
        # (1/sqrt(hs) is pre-folded into the Wq columns at parameter-prep time.)
        x2d = x_ref[...].reshape(Bb * T, C)                       # bf16
        qkv = jnp.dot(x2d, wqkv_ref[...],
                      preferred_element_type=jnp.float32)         # (Bb*T, 3*HS) f32

        # ---- per-head scores / softmax / PV; head outputs go straight into a VMEM slab ----
        for h in range(H):                                        # static, small H
            q = qkv[:, h * hs:(h + 1) * hs].astype(jnp.bfloat16).reshape(Bb, T, hs)
            k = qkv[:, HS + h * hs:HS + (h + 1) * hs].astype(jnp.bfloat16).reshape(Bb, T, hs)
            v = qkv[:, 2 * HS + h * hs:2 * HS + (h + 1) * hs].astype(jnp.bfloat16).reshape(Bb, T, hs)

            s = jnp.einsum('bqd,bkd->bqk', q, k,
                           preferred_element_type=jnp.float32)    # (Bb, T, T) f32
            s = s - jnp.max(s, axis=-1, keepdims=True)
            e = jnp.exp(s)
            p = e / jnp.sum(e, axis=-1, keepdims=True)            # exact softmax (rows sum to 1)
            if return_attn_maps:
                attn_ref[h] = p.astype(attn_ref.dtype)            # (Bb, T, T)
            # NOTE: PV uses p cast to bf16 for the MXU; the stored map above is the f32 p.
            pv = jnp.einsum('bqk,bkd->bqd', p.astype(jnp.bfloat16), v,
                            preferred_element_type=jnp.float32)   # (Bb, T, hs)
            heads_ref[:, h * hs:(h + 1) * hs] = pv.reshape(Bb * T, hs).astype(heads_ref.dtype)

        # ---- single wide output projection on the concatenated heads ----
        out = jnp.dot(heads_ref[...], wp_ref[...],
                      preferred_element_type=jnp.float32) + bp_ref[...]
        o_ref[...] = out.reshape(Bb, T, C).astype(o_ref.dtype)

    return kernel


def _physical_vmem_bytes() -> int:
    try:
        return int(pltpu.get_tpu_info().vmem_capacity_bytes)
    except Exception:
        return 64 * 1024 * 1024          # conservative default (v7x per-TensorCore)


def _step_vmem_bytes(block_b, *, T, C, H, hs, attn_itemsize):
    """Rough per-grid-step VMEM estimate (double-buffered I/O + weights, plus intermediates)."""
    HS = H * hs
    rows = block_b * T
    x_blk = rows * C * 2                                   # bf16 input block
    out_blk = rows * C * 4                                 # f32 output block
    attn_blk = H * block_b * T * T * attn_itemsize         # attention-map block (0 if disabled)
    weights = (C * 3 * HS + HS * C) * 2 + C * 4            # bf16 Wqkv + Wp, f32 bias
    scratch = rows * HS * 2                                 # heads slab (bf16, single-buffered)
    interm = rows * 3 * HS * 4                              # qkv f32
    interm += 3 * block_b * T * T * 4 + block_b * T * T * 2  # s / e / p (one head at a time)
    interm += rows * C * 4                                  # projection result
    return 2 * (x_blk + out_blk + attn_blk + weights) + scratch + interm


def _pick_block_b(B, T, step_bytes, vmem_budget, target_rows=256):
    """Largest batch block with M = block_b*T <= target_rows that fits the VMEM budget,
    preferring >= 2 grid steps so megacore / both v7x TensorCores get work."""
    best = 1
    for bb in range(1, B + 1):
        if B % bb:
            continue
        if step_bytes(bb) > vmem_budget:
            continue
        if bb > 1 and bb * T > target_rows:
            continue
        if B // bb >= 2 or B == 1:
            best = max(best, bb)
    return best


def prepare_mha_params(params):
    """One-time parameter prep (hoisted out of the forward): fuse per-head Q/K/V weights into
    a single bf16 (C, 3*H*hs) matrix with 1/sqrt(hs) folded into the Q columns, and cast the
    output projection to bf16."""
    H, C, hs = params["wq"].shape
    HS = H * hs
    scale = 1.0 / math.sqrt(hs)

    def fuse(w):                              # (H, C, hs) -> (C, H*hs), head-major columns
        return jnp.transpose(w, (1, 0, 2)).reshape(C, HS)

    wqkv = jnp.concatenate(
        [fuse(params["wq"]) * scale, fuse(params["wk"]), fuse(params["wv"])],
        axis=1).astype(jnp.bfloat16)                                  # (C, 3*HS)
    return {
        "wqkv": wqkv,
        "wp": params["wp"].astype(jnp.bfloat16),                      # (HS, C)
        "bp": params["bp"].reshape(1, C).astype(jnp.float32),         # (1, C)
        "num_heads": H,
        "head_size": hs,
    }


def multi_head_attention(x, params, *, block_b=None, return_attn_maps=True,
                         attn_dtype=jnp.float32):
    """x: (B, T, C).  Returns (out (B,T,C), [per-head (B,T,T) attention maps] or None)."""
    if "wqkv" not in params:                  # accept raw per-head params too
        params = prepare_mha_params(params)
    H, hs = params["num_heads"], params["head_size"]
    HS = H * hs
    B, T, C = x.shape
    assert params["wqkv"].shape == (C, 3 * HS)

    attn_itemsize = jnp.dtype(attn_dtype).itemsize if return_attn_maps else 0
    phys_vmem = _physical_vmem_bytes()
    step_bytes = functools.partial(_step_vmem_bytes, T=T, C=C, H=H, hs=hs,
                                   attn_itemsize=attn_itemsize)
    if block_b is None:
        block_b = _pick_block_b(B, T, step_bytes, int(0.9 * phys_vmem))
    assert B % block_b == 0
    grid_b = B // block_b
    vmem_limit = int(min(phys_vmem, max(32 * 1024 * 1024, 2 * step_bytes(block_b))))

    kernel = _make_mha_kernel(H, hs, return_attn_maps)

    out_block = pl.BlockSpec((block_b, T, C), lambda b: (b, 0, 0))
    if return_attn_maps:
        out_shape = (jax.ShapeDtypeStruct((B, T, C), x.dtype),
                     jax.ShapeDtypeStruct((H, B, T, T), attn_dtype))
        out_specs = (out_block,
                     pl.BlockSpec((H, block_b, T, T), lambda b: (0, b, 0, 0)))
    else:
        out_shape = jax.ShapeDtypeStruct((B, T, C), x.dtype)
        out_specs = out_block

    result = pl.pallas_call(
        kernel,
        out_shape=out_shape,
        grid=(grid_b,),
        in_specs=[
            pl.BlockSpec((block_b, T, C), lambda b: (b, 0, 0)),   # x block (bf16)
            pl.BlockSpec((C, 3 * HS), lambda b: (0, 0)),          # fused Wqkv (constant)
            pl.BlockSpec((HS, C), lambda b: (0, 0)),              # Wproj (constant)
            pl.BlockSpec((1, C), lambda b: (0, 0)),               # bproj (constant)
        ],
        out_specs=out_specs,
        scratch_shapes=[pltpu.VMEM((block_b * T, HS), jnp.bfloat16)],  # heads slab
        compiler_params=pltpu.CompilerParams(
            dimension_semantics=("parallel",),
            vmem_limit_bytes=vmem_limit),
    )(x.astype(jnp.bfloat16), params["wqkv"], params["wp"], params["bp"])

    if return_attn_maps:
        out, attn = result
        # PyTorch returns a python list of per-head (B, T, T) attention maps.
        return out, [attn[h] for h in range(H)]
    return result, None


def reference_mha(x, p):
    """Pure-JAX f32 reference mirroring the PyTorch module exactly (mask=None, dropout=0)."""
    H, C, hs = p["wq"].shape
    outs, maps = [], []
    for h in range(H):
        q = x @ p["wq"][h]
        k = x @ p["wk"][h]
        v = x @ p["wv"][h]
        wei = jax.nn.softmax(q @ jnp.swapaxes(k, -1, -2) * hs ** -0.5, axis=-1)
        maps.append(wei)
        outs.append(wei @ v)
    cat = jnp.concatenate(outs, axis=-1)
    return cat @ p["wp"] + p["bp"], maps


if __name__ == "__main__":
    # Small shapes consistent with the module (block_size = seq = 8).
    B, T = 2, 8
    n_embd, num_heads = 32, 4
    head_size = n_embd // num_heads

    key = jax.random.PRNGKey(0)
    ks = jax.random.split(key, 6)
    s = 0.1
    params = {
        "wq": s * jax.random.normal(ks[0], (num_heads, n_embd, head_size), jnp.float32),
        "wk": s * jax.random.normal(ks[1], (num_heads, n_embd, head_size), jnp.float32),
        "wv": s * jax.random.normal(ks[2], (num_heads, n_embd, head_size), jnp.float32),
        "wp": s * jax.random.normal(ks[3], (num_heads * head_size, n_embd), jnp.float32),
        "bp": s * jax.random.normal(ks[4], (n_embd,), jnp.float32),
    }
    x = jax.random.normal(ks[5], (B, T, n_embd), jnp.float32)

    prepared = prepare_mha_params(params)        # one-time weight prep, reused across calls

    out, attn_maps = multi_head_attention(x, prepared)
    out = jax.block_until_ready(out)
    attn_maps = [jax.block_until_ready(a) for a in attn_maps]

    # Correctness vs pure-JAX f32 reference (kernel uses bf16 MXU operands with f32
    # accumulation, so tolerances are set accordingly).
    out_ref, maps_ref = reference_mha(x, params)
    assert out.shape == (B, T, n_embd)
    assert len(attn_maps) == num_heads and attn_maps[0].shape == (B, T, T)
    assert jnp.allclose(out, out_ref, rtol=2e-2, atol=2e-2), \
        f"out mismatch: max abs diff {float(jnp.max(jnp.abs(out - out_ref)))}"
    for a, ar in zip(attn_maps, maps_ref):
        assert jnp.allclose(a, ar, rtol=2e-2, atol=2e-2), \
            f"attn mismatch: max abs diff {float(jnp.max(jnp.abs(a - ar)))}"

    # Exercise the fast path that skips the (H,B,T,T) attention-map writeback entirely.
    out2, no_maps = multi_head_attention(x, prepared, return_attn_maps=False)
    out2 = jax.block_until_ready(out2)
    assert no_maps is None
    assert jnp.allclose(out2, out_ref, rtol=2e-2, atol=2e-2), \
        f"out (no-maps) mismatch: max abs diff {float(jnp.max(jnp.abs(out2 - out_ref)))}"

    print("KERNEL_OK")
</pallas_src>

<mosaic_0001>
module attributes {stable_mosaic.version = 11 : i64} {
  func.func @kernel(%arg0: i32, %arg1: memref<1x8x32xbf16, #tpu.memory_space<vmem>>, %arg2: memref<32x96xbf16, #tpu.memory_space<vmem>>, %arg3: memref<32x32xbf16, #tpu.memory_space<vmem>>, %arg4: memref<1x32xf32, #tpu.memory_space<vmem>>, %arg5: memref<1x8x32xf32, #tpu.memory_space<vmem>>, %arg6: memref<4x1x8x8xf32, #tpu.memory_space<vmem>>, %arg7: memref<8x32xbf16, #tpu.memory_space<vmem>>) attributes {dimension_semantics = [#tpu.dimension_semantics<parallel>], iteration_bounds = array<i64: 2>, scalar_prefetch = 0 : i64, scratch_operands = 1 : i64, tpu.core_type = #tpu.core_type<tc>, window_params = [{transform_indices = @transform_0, window_bounds = array<i64: 1, 8, 32>}, {pipeline_mode = #tpu.pipeline_mode<synchronous>, transform_indices = @transform_1, window_bounds = array<i64: 32, 96>}, {pipeline_mode = #tpu.pipeline_mode<synchronous>, transform_indices = @transform_2, window_bounds = array<i64: 32, 32>}, {pipeline_mode = #tpu.pipeline_mode<synchronous>, transform_indices = @transform_3, window_bounds = array<i64: 1, 32>}, {transform_indices = @transform_4, window_bounds = array<i64: 1, 8, 32>}, {transform_indices = @transform_5, window_bounds = array<i64: 4, 1, 8, 8>}]} {
    %c0 = arith.constant 0 : index
    %c0_0 = arith.constant 0 : index
    %c0_1 = arith.constant 0 : index
    %0 = vector.load %arg1[%c0, %c0_0, %c0_1] : memref<1x8x32xbf16, #tpu.memory_space<vmem>>, vector<1x8x32xbf16>
    %1 = vector.shape_cast %0 : vector<1x8x32xbf16> to vector<8x32xbf16>
    %c0_2 = arith.constant 0 : index
    %c0_3 = arith.constant 0 : index
    %2 = vector.load %arg2[%c0_2, %c0_3] : memref<32x96xbf16, #tpu.memory_space<vmem>>, vector<32x96xbf16>
    %cst = arith.constant dense<0.000000e+00> : vector<8x96xf32>
    %3 = tpu.matmul %1, %2, %cst {dimension_numbers = #tpu.dot_dimension_numbers<[1], [0], [0], [1], [0, 0, 1, 1], [], []>} : vector<8x32xbf16>, vector<32x96xbf16>, vector<8x96xf32> -> vector<8x96xf32>
    %4 = vector.extract_strided_slice %3 {offsets = [0, 0], sizes = [8, 8], strides = [1, 1]} : vector<8x96xf32> to vector<8x8xf32>
    %5 = arith.truncf %4 : vector<8x8xf32> to vector<8x8xbf16>
    %6 = vector.shape_cast %5 : vector<8x8xbf16> to vector<1x8x8xbf16>
    %7 = vector.extract_strided_slice %3 {offsets = [0, 32], sizes = [8, 8], strides = [1, 1]} : vector<8x96xf32> to vector<8x8xf32>
    %8 = arith.truncf %7 : vector<8x8xf32> to vector<8x8xbf16>
    %9 = vector.shape_cast %8 : vector<8x8xbf16> to vector<1x8x8xbf16>
    %10 = vector.extract_strided_slice %3 {offsets = [0, 64], sizes = [8, 8], strides = [1, 1]} : vector<8x96xf32> to vector<8x8xf32>
    %11 = arith.truncf %10 : vector<8x8xf32> to vector<8x8xbf16>
    %12 = vector.shape_cast %11 : vector<8x8xbf16> to vector<1x8x8xbf16>
    "tpu.trace_start"() <{level = 10 : i32, message = "bqd,bkd->bqk"}> : () -> ()
    %cst_4 = arith.constant dense<0.000000e+00> : vector<1x8x8xf32>
    %13 = tpu.matmul %6, %9, %cst_4 {dimension_numbers = #tpu.dot_dimension_numbers<[2], [2], [1], [1], [0, 0, 0, 1, 1, 1], [0], [0]>} : vector<1x8x8xbf16>, vector<1x8x8xbf16>, vector<1x8x8xf32> -> vector<1x8x8xf32>
    "tpu.trace_stop"() : () -> ()
    %cst_5 = arith.constant dense<0xFF800000> : vector<1x8xf32>
    %14 = vector.multi_reduction <maximumf>, %13, %cst_5 [2] : vector<1x8x8xf32> to vector<1x8xf32>
    %15 = vector.shape_cast %14 : vector<1x8xf32> to vector<1x8x1xf32>
    %16 = vector.broadcast %15 : vector<1x8x1xf32> to vector<1x8x8xf32>
    %17 = arith.subf %13, %16 : vector<1x8x8xf32>
    %18 = math.exp %17 : vector<1x8x8xf32>
    %cst_6 = arith.constant dense<0.000000e+00> : vector<1x8xf32>
    %19 = vector.multi_reduction <add>, %18, %cst_6 [2] : vector<1x8x8xf32> to vector<1x8xf32>
    %20 = vector.shape_cast %19 : vector<1x8xf32> to vector<1x8x1xf32>
    %21 = vector.broadcast %20 : vector<1x8x1xf32> to vector<1x8x8xf32>
    %22 = arith.divf %18, %21 : vector<1x8x8xf32>
    %c0_7 = arith.constant 0 : index
    %c0_8 = arith.constant 0 : index
    %c0_9 = arith.constant 0 : index
    %c0_10 = arith.constant 0 : index
    %23 = vector.load %arg6[%c0_7, %c0_8, %c0_9, %c0_10] : memref<4x1x8x8xf32, #tpu.memory_space<vmem>>, vector<1x1x8x8xf32>
    %24 = vector.shape_cast %23 : vector<1x1x8x8xf32> to vector<1x8x8xf32>
    %25 = vector.shape_cast %22 : vector<1x8x8xf32> to vector<1x1x8x8xf32>
    tpu.vector_store %arg6[%c0_7, %c0_8, %c0_9, %c0_10], %25 {strides = array<i32>} : memref<4x1x8x8xf32, #tpu.memory_space<vmem>>, vector<1x1x8x8xf32>,
    %26 = arith.truncf %22 : vector<1x8x8xf32> to vector<1x8x8xbf16>
    "tpu.trace_start"() <{level = 10 : i32, message = "bqk,bkd->bqd"}> : () -> ()
    %cst_11 = arith.constant dense<0.000000e+00> : vector<1x8x8xf32>
    %27 = tpu.matmul %26, %12, %cst_11 {dimension_numbers = #tpu.dot_dimension_numbers<[2], [1], [1], [2], [0, 0, 0, 1, 1, 2], [0], [0]>} : vector<1x8x8xbf16>, vector<1x8x8xbf16>, vector<1x8x8xf32> -> vector<1x8x8xf32>
    "tpu.trace_stop"() : () -> ()
    %28 = vector.shape_cast %27 : vector<1x8x8xf32> to vector<8x8xf32>
    %29 = arith.truncf %28 : vector<8x8xf32> to vector<8x8xbf16>
    %c0_12 = arith.constant 0 : index
    %c0_13 = arith.constant 0 : index
    %30 = vector.load %arg7[%c0_12, %c0_13] : memref<8x32xbf16, #tpu.memory_space<vmem>>, vector<8x8xbf16>
    tpu.vector_store %arg7[%c0_12, %c0_13], %29 {strides = array<i32>} : memref<8x32xbf16, #tpu.memory_space<vmem>>, vector<8x8xbf16>,
    %31 = vector.extract_strided_slice %3 {offsets = [0, 8], sizes = [8, 8], strides = [1, 1]} : vector<8x96xf32> to vector<8x8xf32>
    %32 = arith.truncf %31 : vector<8x8xf32> to vector<8x8xbf16>
    %33 = vector.shape_cast %32 : vector<8x8xbf16> to vector<1x8x8xbf16>
    %34 = vector.extract_strided_slice %3 {offsets = [0, 40], sizes = [8, 8], strides = [1, 1]} : vector<8x96xf32> to vector<8x8xf32>
    %35 = arith.truncf %34 : vector<8x8xf32> to vector<8x8xbf16>
    %36 = vector.shape_cast %35 : vector<8x8xbf16> to vector<1x8x8xbf16>
    %37 = vector.extract_strided_slice %3 {offsets = [0, 72], sizes = [8, 8], strides = [1, 1]} : vector<8x96xf32> to vector<8x8xf32>
    %38 = arith.truncf %37 : vector<8x8xf32> to vector<8x8xbf16>
    %39 = vector.shape_cast %38 : vector<8x8xbf16> to vector<1x8x8xbf16>
    "tpu.trace_start"() <{level = 10 : i32, message = "bqd,bkd->bqk"}> : () -> ()
    %cst_14 = arith.constant dense<0.000000e+00> : vector<1x8x8xf32>
    %40 = tpu.matmul %33, %36, %cst_14 {dimension_numbers = #tpu.dot_dimension_numbers<[2], [2], [1], [1], [0, 0, 0, 1, 1, 1], [0], [0]>} : vector<1x8x8xbf16>, vector<1x8x8xbf16>, vector<1x8x8xf32> -> vector<1x8x8xf32>
    "tpu.trace_stop"() : () -> ()
    %cst_15 = arith.constant dense<0xFF800000> : vector<1x8xf32>
    %41 = vector.multi_reduction <maximumf>, %40, %cst_15 [2] : vector<1x8x8xf32> to vector<1x8xf32>
    %42 = vector.shape_cast %41 : vector<1x8xf32> to vector<1x8x1xf32>
    %43 = vector.broadcast %42 : vector<1x8x1xf32> to vector<1x8x8xf32>
    %44 = arith.subf %40, %43 : vector<1x8x8xf32>
    %45 = math.exp %44 : vector<1x8x8xf32>
    %cst_16 = arith.constant dense<0.000000e+00> : vector<1x8xf32>
    %46 = vector.multi_reduction <add>, %45, %cst_16 [2] : vector<1x8x8xf32> to vector<1x8xf32>
    %47 = vector.shape_cast %46 : vector<1x8xf32> to vector<1x8x1xf32>
    %48 = vector.broadcast %47 : vector<1x8x1xf32> to vector<1x8x8xf32>
    %49 = arith.divf %45, %48 : vector<1x8x8xf32>
    %c1 = arith.constant 1 : index
    %c0_17 = arith.constant 0 : index
    %c0_18 = arith.constant 0 : index
    %c0_19 = arith.constant 0 : index
    %50 = vector.load %arg6[%c1, %c0_17, %c0_18, %c0_19] : memref<4x1x8x8xf32, #tpu.memory_space<vmem>>, vector<1x1x8x8xf32>
    %51 = vector.shape_cast %50 : vector<1x1x8x8xf32> to vector<1x8x8xf32>
    %52 = vector.shape_cast %49 : vector<1x8x8xf32> to vector<1x1x8x8xf32>
    tpu.vector_store %arg6[%c1, %c0_17, %c0_18, %c0_19], %52 {strides = array<i32>} : memref<4x1x8x8xf32, #tpu.memory_space<vmem>>, vector<1x1x8x8xf32>,
    %53 = arith.truncf %49 : vector<1x8x8xf32> to vector<1x8x8xbf16>
    "tpu.trace_start"() <{level = 10 : i32, message = "bqk,bkd->bqd"}> : () -> ()
    %cst_20 = arith.constant dense<0.000000e+00> : vector<1x8x8xf32>
    %54 = tpu.matmul %53, %39, %cst_20 {dimension_numbers = #tpu.dot_dimension_numbers<[2], [1], [1], [2], [0, 0, 0, 1, 1, 2], [0], [0]>} : vector<1x8x8xbf16>, vector<1x8x8xbf16>, vector<1x8x8xf32> -> vector<1x8x8xf32>
    "tpu.trace_stop"() : () -> ()
    %55 = vector.shape_cast %54 : vector<1x8x8xf32> to vector<8x8xf32>
    %56 = arith.truncf %55 : vector<8x8xf32> to vector<8x8xbf16>
    %c0_21 = arith.constant 0 : index
    %c8 = arith.constant 8 : index
    %57 = vector.load %arg7[%c0_21, %c8] : memref<8x32xbf16, #tpu.memory_space<vmem>>, vector<8x8xbf16>
    tpu.vector_store %arg7[%c0_21, %c8], %56 {strides = array<i32>} : memref<8x32xbf16, #tpu.memory_space<vmem>>, vector<8x8xbf16>,
    %58 = vector.extract_strided_slice %3 {offsets = [0, 16], sizes = [8, 8], strides = [1, 1]} : vector<8x96xf32> to vector<8x8xf32>
    %59 = arith.truncf %58 : vector<8x8xf32> to vector<8x8xbf16>
    %60 = vector.shape_cast %59 : vector<8x8xbf16> to vector<1x8x8xbf16>
    %61 = vector.extract_strided_slice %3 {offsets = [0, 48], sizes = [8, 8], strides = [1, 1]} : vector<8x96xf32> to vector<8x8xf32>
    %62 = arith.truncf %61 : vector<8x8xf32> to vector<8x8xbf16>
    %63 = vector.shape_cast %62 : vector<8x8xbf16> to vector<1x8x8xbf16>
    %64 = vector.extract_strided_slice %3 {offsets = [0, 80], sizes = [8, 8], strides = [1, 1]} : vector<8x96xf32> to vector<8x8xf32>
    %65 = arith.truncf %64 : vector<8x8xf32> to vector<8x8xbf16>
    %66 = vector.shape_cast %65 : vector<8x8xbf16> to vector<1x8x8xbf16>
    "tpu.trace_start"() <{level = 10 : i32, message = "bqd,bkd->bqk"}> : () -> ()
    %cst_22 = arith.constant dense<0.000000e+00> : vector<1x8x8xf32>
    %67 = tpu.matmul %60, %63, %cst_22 {dimension_numbers = #tpu.dot_dimension_numbers<[2], [2], [1], [1], [0, 0, 0, 1, 1, 1], [0], [0]>} : vector<1x8x8xbf16>, vector<1x8x8xbf16>, vector<1x8x8xf32> -> vector<1x8x8xf32>
    "tpu.trace_stop"() : () -> ()
    %cst_23 = arith.constant dense<0xFF800000> : vector<1x8xf32>
    %68 = vector.multi_reduction <maximumf>, %67, %cst_23 [2] : vector<1x8x8xf32> to vector<1x8xf32>
    %69 = vector.shape_cast %68 : vector<1x8xf32> to vector<1x8x1xf32>
    %70 = vector.broadcast %69 : vector<1x8x1xf32> to vector<1x8x8xf32>
    %71 = arith.subf %67, %70 : vector<1x8x8xf32>
    %72 = math.exp %71 : vector<1x8x8xf32>
    %cst_24 = arith.constant dense<0.000000e+00> : vector<1x8xf32>
    %73 = vector.multi_reduction <add>, %72, %cst_24 [2] : vector<1x8x8xf32> to vector<1x8xf32>
    %74 = vector.shape_cast %73 : vector<1x8xf32> to vector<1x8x1xf32>
    %75 = vector.broadcast %74 : vector<1x8x1xf32> to vector<1x8x8xf32>
    %76 = arith.divf %72, %75 : vector<1x8x8xf32>
    %c2 = arith.constant 2 : index
    %c0_25 = arith.constant 0 : index
    %c0_26 = arith.constant 0 : index
    %c0_27 = arith.constant 0 : index
    %77 = vector.load %arg6[%c2, %c0_25, %c0_26, %c0_27] : memref<4x1x8x8xf32, #tpu.memory_space<vmem>>, vector<1x1x8x8xf32>
    %78 = vector.shape_cast %77 : vector<1x1x8x8xf32> to vector<1x8x8xf32>
    %79 = vector.shape_cast %76 : vector<1x8x8xf32> to vector<1x1x8x8xf32>
    tpu.vector_store %arg6[%c2, %c0_25, %c0_26, %c0_27], %79 {strides = array<i32>} : memref<4x1x8x8xf32, #tpu.memory_space<vmem>>, vector<1x1x8x8xf32>,
    %80 = arith.truncf %76 : vector<1x8x8xf32> to vector<1x8x8xbf16>
    "tpu.trace_start"() <{level = 10 : i32, message = "bqk,bkd->bqd"}> : () -> ()
    %cst_28 = arith.constant dense<0.000000e+00> : vector<1x8x8xf32>
    %81 = tpu.matmul %80, %66, %cst_28 {dimension_numbers = #tpu.dot_dimension_numbers<[2], [1], [1], [2], [0, 0, 0, 1, 1, 2], [0], [0]>} : vector<1x8x8xbf16>, vector<1x8x8xbf16>, vector<1x8x8xf32> -> vector<1x8x8xf32>
    "tpu.trace_stop"() : () -> ()
    %82 = vector.shape_cast %81 : vector<1x8x8xf32> to vector<8x8xf32>
    %83 = arith.truncf %82 : vector<8x8xf32> to vector<8x8xbf16>
    %c0_29 = arith.constant 0 : index
    %c16 = arith.constant 16 : index
    %84 = vector.load %arg7[%c0_29, %c16] : memref<8x32xbf16, #tpu.memory_space<vmem>>, vector<8x8xbf16>
    tpu.vector_store %arg7[%c0_29, %c16], %83 {strides = array<i32>} : memref<8x32xbf16, #tpu.memory_space<vmem>>, vector<8x8xbf16>,
    %85 = vector.extract_strided_slice %3 {offsets = [0, 24], sizes = [8, 8], strides = [1, 1]} : vector<8x96xf32> to vector<8x8xf32>
    %86 = arith.truncf %85 : vector<8x8xf32> to vector<8x8xbf16>
    %87 = vector.shape_cast %86 : vector<8x8xbf16> to vector<1x8x8xbf16>
    %88 = vector.extract_strided_slice %3 {offsets = [0, 56], sizes = [8, 8], strides = [1, 1]} : vector<8x96xf32> to vector<8x8xf32>
    %89 = arith.truncf %88 : vector<8x8xf32> to vector<8x8xbf16>
    %90 = vector.shape_cast %89 : vector<8x8xbf16> to vector<1x8x8xbf16>
    %91 = vector.extract_strided_slice %3 {offsets = [0, 88], sizes = [8, 8], strides = [1, 1]} : vector<8x96xf32> to vector<8x8xf32>
    %92 = arith.truncf %91 : vector<8x8xf32> to vector<8x8xbf16>
    %93 = vector.shape_cast %92 : vector<8x8xbf16> to vector<1x8x8xbf16>
    "tpu.trace_start"() <{level = 10 : i32, message = "bqd,bkd->bqk"}> : () -> ()
    %cst_30 = arith.constant dense<0.000000e+00> : vector<1x8x8xf32>
    %94 = tpu.matmul %87, %90, %cst_30 {dimension_numbers = #tpu.dot_dimension_numbers<[2], [2], [1], [1], [0, 0, 0, 1, 1, 1], [0], [0]>} : vector<1x8x8xbf16>, vector<1x8x8xbf16>, vector<1x8x8xf32> -> vector<1x8x8xf32>
    "tpu.trace_stop"() : () -> ()
    %cst_31 = arith.constant dense<0xFF800000> : vector<1x8xf32>
    %95 = vector.multi_reduction <maximumf>, %94, %cst_31 [2] : vector<1x8x8xf32> to vector<1x8xf32>
    %96 = vector.shape_cast %95 : vector<1x8xf32> to vector<1x8x1xf32>
    %97 = vector.broadcast %96 : vector<1x8x1xf32> to vector<1x8x8xf32>
    %98 = arith.subf %94, %97 : vector<1x8x8xf32>
    %99 = math.exp %98 : vector<1x8x8xf32>
    %cst_32 = arith.constant dense<0.000000e+00> : vector<1x8xf32>
    %100 = vector.multi_reduction <add>, %99, %cst_32 [2] : vector<1x8x8xf32> to vector<1x8xf32>
    %101 = vector.shape_cast %100 : vector<1x8xf32> to vector<1x8x1xf32>
    %102 = vector.broadcast %101 : vector<1x8x1xf32> to vector<1x8x8xf32>
    %103 = arith.divf %99, %102 : vector<1x8x8xf32>
    %c3 = arith.constant 3 : index
    %c0_33 = arith.constant 0 : index
    %c0_34 = arith.constant 0 : index
    %c0_35 = arith.constant 0 : index
    %104 = vector.load %arg6[%c3, %c0_33, %c0_34, %c0_35] : memref<4x1x8x8xf32, #tpu.memory_space<vmem>>, vector<1x1x8x8xf32>
    %105 = vector.shape_cast %104 : vector<1x1x8x8xf32> to vector<1x8x8xf32>
    %106 = vector.shape_cast %103 : vector<1x8x8xf32> to vector<1x1x8x8xf32>
    tpu.vector_store %arg6[%c3, %c0_33, %c0_34, %c0_35], %106 {strides = array<i32>} : memref<4x1x8x8xf32, #tpu.memory_space<vmem>>, vector<1x1x8x8xf32>,
    %107 = arith.truncf %103 : vector<1x8x8xf32> to vector<1x8x8xbf16>
    "tpu.trace_start"() <{level = 10 : i32, message = "bqk,bkd->bqd"}> : () -> ()
    %cst_36 = arith.constant dense<0.000000e+00> : vector<1x8x8xf32>
    %108 = tpu.matmul %107, %93, %cst_36 {dimension_numbers = #tpu.dot_dimension_numbers<[2], [1], [1], [2], [0, 0, 0, 1, 1, 2], [0], [0]>} : vector<1x8x8xbf16>, vector<1x8x8xbf16>, vector<1x8x8xf32> -> vector<1x8x8xf32>
    "tpu.trace_stop"() : () -> ()
    %109 = vector.shape_cast %108 : vector<1x8x8xf32> to vector<8x8xf32>
    %110 = arith.truncf %109 : vector<8x8xf32> to vector<8x8xbf16>
    %c0_37 = arith.constant 0 : index
    %c24 = arith.constant 24 : index
    %111 = vector.load %arg7[%c0_37, %c24] : memref<8x32xbf16, #tpu.memory_space<vmem>>, vector<8x8xbf16>
    tpu.vector_store %arg7[%c0_37, %c24], %110 {strides = array<i32>} : memref<8x32xbf16, #tpu.memory_space<vmem>>, vector<8x8xbf16>,
    %c0_38 = arith.constant 0 : index
    %c0_39 = arith.constant 0 : index
    %112 = vector.load %arg7[%c0_38, %c0_39] : memref<8x32xbf16, #tpu.memory_space<vmem>>, vector<8x32xbf16>
    %c0_40 = arith.constant 0 : index
    %c0_41 = arith.constant 0 : index
    %113 = vector.load %arg3[%c0_40, %c0_41] : memref<32x32xbf16, #tpu.memory_space<vmem>>, vector<32x32xbf16>
    %cst_42 = arith.constant dense<0.000000e+00> : vector<8x32xf32>
    %114 = tpu.matmul %112, %113, %cst_42 {dimension_numbers = #tpu.dot_dimension_numbers<[1], [0], [0], [1], [0, 0, 1, 1], [], []>} : vector<8x32xbf16>, vector<32x32xbf16>, vector<8x32xf32> -> vector<8x32xf32>
    %c0_43 = arith.constant 0 : index
    %c0_44 = arith.constant 0 : index
    %115 = vector.load %arg4[%c0_43, %c0_44] : memref<1x32xf32, #tpu.memory_space<vmem>>, vector<1x32xf32>
    %116 = vector.broadcast %115 : vector<1x32xf32> to vector<8x32xf32>
    %117 = arith.addf %114, %116 : vector<8x32xf32>
    %118 = vector.shape_cast %117 : vector<8x32xf32> to vector<1x8x32xf32>
    %c0_45 = arith.constant 0 : index
    %c0_46 = arith.constant 0 : index
    %c0_47 = arith.constant 0 : index
    %119 = vector.load %arg5[%c0_45, %c0_46, %c0_47] : memref<1x8x32xf32, #tpu.memory_space<vmem>>, vector<1x8x32xf32>
    tpu.vector_store %arg5[%c0_45, %c0_46, %c0_47], %118 {strides = array<i32>} : memref<1x8x32xf32, #tpu.memory_space<vmem>>, vector<1x8x32xf32>,
    return
  }
  func.func @transform_0(%arg0: i32) -> (i32, i32, i32) {
    %c0_i32 = arith.constant 0 : i32
    %c0_i32_0 = arith.constant 0 : i32
    %c0_i32_1 = arith.constant 0 : i32
    return %arg0, %c0_i32, %c0_i32_0 : i32, i32, i32
  }
  func.func @transform_1(%arg0: i32) -> (i32, i32) {
    %c0_i32 = arith.constant 0 : i32
    %c0_i32_0 = arith.constant 0 : i32
    %c0_i32_1 = arith.constant 0 : i32
    return %c0_i32, %c0_i32_0 : i32, i32
  }
  func.func @transform_2(%arg0: i32) -> (i32, i32) {
    %c0_i32 = arith.constant 0 : i32
    %c0_i32_0 = arith.constant 0 : i32
    %c0_i32_1 = arith.constant 0 : i32
    return %c0_i32, %c0_i32_0 : i32, i32
  }
  func.func @transform_3(%arg0: i32) -> (i32, i32) {
    %c0_i32 = arith.constant 0 : i32
    %c0_i32_0 = arith.constant 0 : i32
    %c0_i32_1 = arith.constant 0 : i32
    return %c0_i32, %c0_i32_0 : i32, i32
  }
  func.func @transform_4(%arg0: i32) -> (i32, i32, i32) {
    %c0_i32 = arith.constant 0 : i32
    %c0_i32_0 = arith.constant 0 : i32
    %c0_i32_1 = arith.constant 0 : i32
    return %arg0, %c0_i32, %c0_i32_0 : i32, i32, i32
  }
  func.func @transform_5(%arg0: i32) -> (i32, i32, i32, i32) {
    %c0_i32 = arith.constant 0 : i32
    %c0_i32_0 = arith.constant 0 : i32
    %c0_i32_1 = arith.constant 0 : i32
    %c0_i32_2 = arith.constant 0 : i32
    return %c0_i32, %arg0, %c0_i32_0, %c0_i32_1 : i32, i32, i32, i32
  }
}

</mosaic_0001>

<llo_original>
// kernel: tpu_custom_call.1
$region0: #{tpu_custom_call.1}
  #allocation0 [shape = 'u32[]', space=smem, size = 0x4, offset = 0x4, fixed_abs, tag = 'smem constant byte address 0x4 - core index']
  #allocation1 [shape = 'u32[144,128]{1,0:T(1,128)}', space=vmem, size = 0x12000, scoped, tag = 'internal scratch']
  #allocation2 [shape = 'bf16[8,32]{1,0:T(8,128)(2,1)}', space=vmem, size = 0x800, scoped, tag = 'scratch operand']
  %s0 = inlined_call_operand.hbm [shape: bf16[2,8,32], index: 0, kind: input, shape index: {}]
  %s1 = inlined_call_operand.hbm [shape: bf16[32,96], index: 1, kind: input, shape index: {}]
  %s2 = inlined_call_operand.hbm [shape: bf16[32,32], index: 2, kind: input, shape index: {}]
  %s3 = inlined_call_operand.vmem [shape: f32[1,32], index: 3, kind: input, shape index: {}]
  %s4 = inlined_call_operand.hbm [shape: f32[2,8,32], index: 4, kind: output, shape index: {0}]
  %s5 = inlined_call_operand.hbm [shape: f32[4,2,8,8], index: 5, kind: output, shape index: {1}]
  %6 = xla_tuple %s4, %s5
  %s7 = sld [smem:[#allocation0]]
  $region69: #{tpu_custom_call.1} parent=0
    _
  %s9 = ssub.s32 1, %s7
  %s10 = scalar_select 0, %s9, %s7
  $region1: #{tpu_custom_call.1} parent=0
    #allocation3 [shape = 'u8[4096]{0}', space=vmem, size = 0x1000, scoped, tag = 'input window, operand 0']
    #allocation4 [shape = 's32[2]{0}', space=sflag, size = 0x8, scoped, tag = 'scoped memory for tpu_custom_call.1']
    #allocation5 [shape = 's32[2]{0}', space=sflag, size = 0x8, scoped, tag = 'scoped memory for tpu_custom_call.1']
    #allocation6 [shape = 'u8[8192]{0}', space=vmem, size = 0x2000, scoped, tag = 'input window, operand 1, single buffered']
    #allocation7 [shape = 's32[1]{0}', space=sflag, size = 0x4, scoped, tag = 'scoped memory for tpu_custom_call.1']
    #allocation8 [shape = 'u8[8192]{0}', space=vmem, size = 0x2000, scoped, tag = 'input window, operand 2, single buffered']
    #allocation9 [shape = 'u8[8192]{0}', space=vmem, size = 0x2000, scoped, tag = 'output window, operand 0']
    #allocation10 [shape = 'u8[32768]{0}', space=vmem, size = 0x8000, scoped, tag = 'output window, operand 1']
    #allocation11 [shape = 's32[2]{0}', space=sflag, size = 0x8, scoped, tag = 'scoped memory for tpu_custom_call.1']
    %11 = vsyncpa [#allocation4], 0
    %s12 = scalar_lea.sflag [#allocation4], 1
    %13 = vsyncpa %s12, 0
    %14 = vsyncpa [#allocation7], 0
    %15 = vsyncpa [#allocation5], 0
    %s16 = scalar_lea.sflag [#allocation5], 1
    %17 = vsyncpa %s16, 0
    %18 = vsyncpa [#allocation11], 0
    %s19 = scalar_lea.sflag [#allocation11], 1
    %20 = vsyncpa %s19, 0
    loop: start=0, step=1, limit=4
    $region2: #{tpu_custom_call.1} parent=1 // loop_pre_header
      _
    $region3: #{tpu_custom_call.1} parent=1 // loop_header
      %s22 = sphi 0, %s26
      %p23 = scmp.ge.s32.totalorder %s22, 4
      %s32 = sphi 0, %s34
      %s35 = sphi 0, %s32
      %s36 = sphi 0, %s35
      %s52 = sphi 0, %s36
      %s56 = sphi 0, %s56
      %s58 = sphi 0, %s56
      %s59 = sphi 0, %s58
      %s73 = sphi 0, %s59
      %s77 = sphi 0, %s77
      %s79 = sphi 0, %s77
      %s80 = sphi 0, %s79
      %s94 = sphi 0, %s80
      %s98 = sphi 0, %s98
      %s100 = sphi 0, %s98
      %s101 = sphi 0, %s100
      %s115 = sphi 0, %s101
      %s121 = sphi 0, %s123
      %s124 = sphi 0, %s121
      %s125 = sphi 0, %s124
      %s141 = sphi 0, %s125
      %s147 = sphi 0, %s149
      %s150 = sphi 0, %s147
      %s151 = sphi 0, %s150
      %s167 = sphi 0, %s151
    $region4: #{tpu_custom_call.1} parent=1 // loop_header_branch
      %25 = sbr.rel (%p23) target = $region8
    $region5: #{tpu_custom_call.1} parent=1 // loop_body
      %s27 = ssub.s32 %s22, 1
      %s28 = ssub.s32 %s22, 2
      %s29 = sadd.s32 %s22, 1
      %s30 = ssub.s32 %s22, %s29
      %p31 = scmp.eq.s32.totalorder %s30, 0
      %s33 = sadd.s32 %s32, 1
      %s34 = scalar_select %p31, %s32, %s33
      %p37 = pneg %p31
      %p38 = scmp.eq.s32.totalorder %s22, 1
      %p39 = por %p37, %p38
      %p40 = scmp.ne.s32.totalorder %s32, %s35
      %p41 = scmp.eq.s32.totalorder %s22, 0
      %p42 = por %p40, %p41
      %p43 = scmp.ne.s32.totalorder %s32, %s35
      %p44 = scmp.eq.s32.totalorder %s27, 1
      %p45 = por %p43, %p44
      %p46 = scmp.ne.s32.totalorder %s35, %s36
      %p47 = scmp.eq.s32.totalorder %s27, 0
      %p48 = por %p46, %p47
      %p49 = scmp.ne.s32.totalorder %s35, %s36
      %p50 = scmp.eq.s32.totalorder %s28, 1
      %p51 = por %p49, %p50
      %p53 = scmp.ne.s32.totalorder %s36, %s52
      %p54 = scmp.eq.s32.totalorder %s28, 0
      %p55 = por %p53, %p54
      %s57 = sadd.s32 %s56, 1
      %p60 = scmp.eq.s32.totalorder %s22, 1
      %p61 = scmp.ne.s32.totalorder %s56, %s58
      %p62 = scmp.eq.s32.totalorder %s22, 0
      %p63 = por %p61, %p62
      %p64 = scmp.ne.s32.totalorder %s56, %s58
      %p65 = scmp.eq.s32.totalorder %s27, 1
      %p66 = por %p64, %p65
      %p67 = scmp.ne.s32.totalorder %s58, %s59
      %p68 = scmp.eq.s32.totalorder %s27, 0
      %p69 = por %p67, %p68
      %p70 = scmp.ne.s32.totalorder %s58, %s59
      %p71 = scmp.eq.s32.totalorder %s28, 1
      %p72 = por %p70, %p71
      %p74 = scmp.ne.s32.totalorder %s59, %s73
      %p75 = scmp.eq.s32.totalorder %s28, 0
      %p76 = por %p74, %p75
      %s78 = sadd.s32 %s77, 1
      %p81 = scmp.eq.s32.totalorder %s22, 1
      %p82 = scmp.ne.s32.totalorder %s77, %s79
      %p83 = scmp.eq.s32.totalorder %s22, 0
      %p84 = por %p82, %p83
      %p85 = scmp.ne.s32.totalorder %s77, %s79
      %p86 = scmp.eq.s32.totalorder %s27, 1
      %p87 = por %p85, %p86
      %p88 = scmp.ne.s32.totalorder %s79, %s80
      %p89 = scmp.eq.s32.totalorder %s27, 0
      %p90 = por %p88, %p89
      %p91 = scmp.ne.s32.totalorder %s79, %s80
      %p92 = scmp.eq.s32.totalorder %s28, 1
      %p93 = por %p91, %p92
      %p95 = scmp.ne.s32.totalorder %s80, %s94
      %p96 = scmp.eq.s32.totalorder %s28, 0
      %p97 = por %p95, %p96
      %s99 = sadd.s32 %s98, 1
      %p102 = scmp.eq.s32.totalorder %s22, 1
      %p103 = scmp.ne.s32.totalorder %s98, %s100
      %p104 = scmp.eq.s32.totalorder %s22, 0
      %p105 = por %p103, %p104
      %p106 = scmp.ne.s32.totalorder %s98, %s100
      %p107 = scmp.eq.s32.totalorder %s27, 1
      %p108 = por %p106, %p107
      %p109 = scmp.ne.s32.totalorder %s100, %s101
      %p110 = scmp.eq.s32.totalorder %s27, 0
      %p111 = por %p109, %p110
      %p112 = scmp.ne.s32.totalorder %s100, %s101
      %p113 = scmp.eq.s32.totalorder %s28, 1
      %p114 = por %p112, %p113
      %p116 = scmp.ne.s32.totalorder %s101, %s115
      %p117 = scmp.eq.s32.totalorder %s28, 0
      %p118 = por %p116, %p117
      %s119 = ssub.s32 %s22, %s29
      %p120 = scmp.eq.s32.totalorder %s119, 0
      %s122 = sadd.s32 %s121, 1
      %s123 = scalar_select %p120, %s121, %s122
      %p126 = pneg %p120
      %p127 = scmp.eq.s32.totalorder %s22, 1
      %p128 = por %p126, %p127
      %p129 = scmp.ne.s32.totalorder %s121, %s124
      %p130 = scmp.eq.s32.totalorder %s22, 0
      %p131 = por %p129, %p130
      %p132 = scmp.ne.s32.totalorder %s121, %s124
      %p133 = scmp.eq.s32.totalorder %s27, 1
      %p134 = por %p132, %p133
      %p135 = scmp.ne.s32.totalorder %s124, %s125
      %p136 = scmp.eq.s32.totalorder %s27, 0
      %p137 = por %p135, %p136
      %p138 = scmp.ne.s32.totalorder %s124, %s125
      %p139 = scmp.eq.s32.totalorder %s28, 1
      %p140 = por %p138, %p139
      %p142 = scmp.ne.s32.totalorder %s125, %s141
      %p143 = scmp.eq.s32.totalorder %s28, 0
      %p144 = por %p142, %p143
      %s145 = ssub.s32 %s22, %s29
      %p146 = scmp.eq.s32.totalorder %s145, 0
      %s148 = sadd.s32 %s147, 1
      %s149 = scalar_select %p146, %s147, %s148
      %p152 = pneg %p146
      %p153 = scmp.eq.s32.totalorder %s22, 1
      %p154 = por %p152, %p153
      %p155 = scmp.ne.s32.totalorder %s147, %s150
      %p156 = scmp.eq.s32.totalorder %s22, 0
      %p157 = por %p155, %p156
      %p158 = scmp.ne.s32.totalorder %s147, %s150
      %p159 = scmp.eq.s32.totalorder %s27, 1
      %p160 = por %p158, %p159
      %p161 = scmp.ne.s32.totalorder %s150, %s151
      %p162 = scmp.eq.s32.totalorder %s27, 0
      %p163 = por %p161, %p162
      %p164 = scmp.ne.s32.totalorder %s150, %s151
      %p165 = scmp.eq.s32.totalorder %s28, 1
      %p166 = por %p164, %p165
      %p168 = scmp.ne.s32.totalorder %s151, %s167
      %p169 = scmp.eq.s32.totalorder %s28, 0
      %p170 = por %p168, %p169
      %p171 = scmp.le.s32.totalorder 1, %s22
      %p172 = scmp.lt.s32.totalorder %s22, 3
      %p173 = pnand %p171, %p172
      %p174 = pneg %p173
      // Predicated region
      $region9: #{tpu_custom_call.1} parent=5 // pred_check
        _
      $region10: #{tpu_custom_call.1} parent=5 // pred_check_branch
        %176 = sbr.rel (%p173) target = $region12
      $region11: #{tpu_custom_call.1} parent=5 // pred_region
        %s177 = ssub.s32 %s22, 1
        // Predicated region
        $region13: #{tpu_custom_call.1} parent=11 // pred_check
          %p178 = pneg %p69
        $region14: #{tpu_custom_call.1} parent=11 // pred_check_branch
          %180 = sbr.rel (%p178) target = $region16
        $region15: #{tpu_custom_call.1} parent=11 // pred_region
          %s182 = ssub.s32 256, 256
          %183 = vsyncadd [#allocation7], %s182
          %s184 = sshll.u32 [#allocation6], 4
          %s185 = int_to_ptr.vmem [resolvable:$true] %s184
          %190 = dma.hbm_to_vmem [thread:$0]  %s1, 256, %s185, [#allocation7], 64, 64, 4
        $region16: #{tpu_custom_call.1} parent=11 // pred_fallthru
          _
        // Predicated region
        $region17: #{tpu_custom_call.1} parent=11 // pred_check
          %p191 = pneg %p90
        $region18: #{tpu_custom_call.1} parent=11 // pred_check_branch
          %193 = sbr.rel (%p191) target = $region20
        $region19: #{tpu_custom_call.1} parent=11 // pred_region
          %s195 = ssub.s32 256, 256
          %196 = vsyncadd [#allocation7], %s195
          %s197 = sshll.u32 [#allocation8], 4
          %s198 = int_to_ptr.vmem [resolvable:$true] %s197
          %203 = dma.hbm_to_vmem [thread:$0]  %s2, 256, %s198, [#allocation7], 64, 64, 4
        $region20: #{tpu_custom_call.1} parent=11 // pred_fallthru
          _
        // Predicated region
        $region21: #{tpu_custom_call.1} parent=11 // pred_check
          %p204 = pneg %p111
        $region22: #{tpu_custom_call.1} parent=11 // pred_check_branch
          %206 = sbr.rel (%p204) target = $region24
        $region23: #{tpu_custom_call.1} parent=11 // pred_region
          _
        $region24: #{tpu_custom_call.1} parent=11 // pred_fallthru
          _
      $region12: #{tpu_custom_call.1} parent=5 // pred_fallthru
        _
      %p207 = scmp.lt.s32.totalorder %s22, 2
      // Predicated region
      $region25: #{tpu_custom_call.1} parent=5 // pred_check
        %p208 = pneg %p207
      $region26: #{tpu_custom_call.1} parent=5 // pred_check_branch
        %210 = sbr.rel (%p208) target = $region28
      $region27: #{tpu_custom_call.1} parent=5 // pred_region
        // Predicated region
        $region29: #{tpu_custom_call.1} parent=27 // pred_check
          %p211 = pneg %p42
        $region30: #{tpu_custom_call.1} parent=27 // pred_check_branch
          %213 = sbr.rel (%p211) target = $region32
        $region31: #{tpu_custom_call.1} parent=27 // pred_region
          %s214 = sand.u32 %s32, 1
          %s215 = scalar_lea.sflag [#allocation4], %s214
          %s216 = sand.u32 %s32, 1
          %s217 = smul.addr %s216, 4
          %s218 = scalar_lea.vmem [#allocation3], %s217
          %s220 = ssub.s32 64, 64
          %221 = vsyncadd %s215, %s220
          %s222 = smul.addr %s22, 64
          %s223 = scalar_lea.hbm %s0, %s222
          %s225 = sshll.u32 %s218, 4
          %s226 = int_to_ptr.vmem [resolvable:$true] %s225
          %228 = dma.hbm_to_vmem [thread:$0]  %s223, 64, %s226, %s215
        $region32: #{tpu_custom_call.1} parent=27 // pred_fallthru
          _
      $region28: #{tpu_custom_call.1} parent=5 // pred_fallthru
        _
      %p229 = scmp.le.s32.totalorder 1, %s22
      %p230 = scmp.lt.s32.totalorder %s22, 3
      %p231 = pnand %p229, %p230
      %p232 = pneg %p231
      // Predicated region
      $region33: #{tpu_custom_call.1} parent=5 // pred_check
        _
      $region34: #{tpu_custom_call.1} parent=5 // pred_check_branch
        %234 = sbr.rel (%p231) target = $region36
      $region35: #{tpu_custom_call.1} parent=5 // pred_region
        %s235 = ssub.s32 %s22, 1
        %s236 = sand.u32 %s35, 1
        %s237 = scalar_lea.sflag [#allocation4], %s236
        %s238 = sand.u32 %s35, 1
        %s239 = smul.addr %s238, 4
        %s240 = scalar_lea.vmem [#allocation3], %s239
        // Predicated region
        $region37: #{tpu_custom_call.1} parent=35 // pred_check
          %p241 = pneg %p48
        $region38: #{tpu_custom_call.1} parent=35 // pred_check_branch
          %243 = sbr.rel (%p241) target = $region40
        $region39: #{tpu_custom_call.1} parent=35 // pred_region
          %244 = dma.done %s237, 64
        $region40: #{tpu_custom_call.1} parent=35 // pred_fallthru
          _
        // Predicated region
        $region41: #{tpu_custom_call.1} parent=35 // pred_check
          %p245 = pneg %p69
        $region42: #{tpu_custom_call.1} parent=35 // pred_check_branch
          %247 = sbr.rel (%p245) target = $region44
        $region43: #{tpu_custom_call.1} parent=35 // pred_region
          %248 = dma.done [#allocation7], 256
        $region44: #{tpu_custom_call.1} parent=35 // pred_fallthru
          _
        // Predicated region
        $region45: #{tpu_custom_call.1} parent=35 // pred_check
          %p249 = pneg %p90
        $region46: #{tpu_custom_call.1} parent=35 // pred_check_branch
          %251 = sbr.rel (%p249) target = $region48
        $region47: #{tpu_custom_call.1} parent=35 // pred_region
          %252 = dma.done [#allocation7], 256
        $region48: #{tpu_custom_call.1} parent=35 // pred_fallthru
          _
        %s253 = sand.u32 %s35, 1
        %s254 = scalar_lea.sflag [#allocation4], %s253
        %s255 = sand.u32 %s35, 1
        %s256 = smul.addr %s255, 4
        %s257 = scalar_lea.vmem [#allocation3], %s256
        %p258 = pneg %p48
        %p259 = pneg %p45
        %p260 = pneg %p69
        %p261 = pneg %p66
        %p262 = pneg %p90
        %p263 = pneg %p87
        %p264 = pneg %p111
        %p265 = pneg %p108
        %p266 = pneg %p137
        %p267 = pneg %p134
        %s268 = sand.u32 %s124, 1
        %s269 = scalar_lea.sflag [#allocation5], %s268
        %s270 = sand.u32 %s124, 1
        %s271 = smul.addr %s270, 8
        %s272 = scalar_lea.vmem [#allocation9], %s271
        %p273 = pneg %p163
        %p274 = pneg %p160
        %s275 = sand.u32 %s150, 1
        %s276 = scalar_lea.sflag [#allocation11], %s275
        %s277 = sand.u32 %s150, 1
        %s278 = smul.addr %s277, 32
        %s279 = scalar_lea.vmem [#allocation10], %s278
        %v281 = vld [vmem:[%s240] sm:$0xf]
        %v282 = vld [vmem:[#allocation6] sm:$0xf]
        %v283 = vld [vmem:[#allocation6 + $0x4] sm:$0xf]
        %v284 = vld [vmem:[#allocation6 + $0x8] sm:$0xf]
        %v285 = vld [vmem:[#allocation6 + $0xc] sm:$0xf]
        %v290 = vunpack.c.l.b16 %v282
        %v291 = vunpack.c.l.b16 %v283
        %v292 = vunpack.c.l.b16 %v284
        %v293 = vunpack.c.l.b16 %v285
        %v294 = vpack.c.b16 %v291, %v290
        %v295 = vpack.c.b16 %v293, %v292
        %vm298 = vcmask 261120
        %v300 = vsel %vm298, %v281, 0
        %302 = vmatprep.subr.bf16.mxu0 0
        %303 = vmatpush1.bf16.msra.mxu0 %v294
        %304 = vmatprep.subr.bf16.mxu0 0
        %305 = vmatpush1.bf16.msra.mxu0 %v295
        %306 = vmatprep.subr.bf16.mxu0 0
        %307 = vmatpush1.bf16.msra.mxu0 0
        %308 = vmatprep.subr.bf16.mxu0 0
        %309 = vmatpush1.bf16.msra.mxu0 0
        %310 = vmatprep.subr.bf16.mxu0 0
        %311 = vmatpush1.bf16.msra.mxu0 0
        %312 = vmatprep.subr.bf16.mxu0 0
        %313 = vmatpush1.bf16.msra.mxu0 0
        %314 = vmatprep.subr.bf16.mxu0 0
        %315 = vmatpush1.bf16.msra.mxu0 0
        %316 = vmatprep.subr.bf16.mxu0 0
        %317 = vmatpush1.bf16.msra.mxu0 0
        %318 = vmatprep.subr.bf16.mxu0 0
        %319 = vmatpush1.bf16.msra.mxu0 0
        %320 = vmatprep.subr.bf16.mxu0 0
        %321 = vmatpush1.bf16.msra.mxu0 0
        %322 = vmatprep.subr.bf16.mxu0 0
        %323 = vmatpush1.bf16.msra.mxu0 0
        %324 = vmatprep.subr.bf16.mxu0 0
        %325 = vmatpush1.bf16.msra.mxu0 0
        %326 = vmatprep.subr.bf16.mxu0 0
        %327 = vmatpush1.bf16.msra.mxu0 0
        %328 = vmatprep.subr.bf16.mxu0 0
        %329 = vmatpush1.bf16.msra.mxu0 0
        %330 = vmatprep.subr.bf16.mxu0 0
        %331 = vmatpush1.bf16.msra.mxu0 0
        %332 = vmatprep.subr.bf16.mxu0 0
        %333 = vmatpush1.bf16.msra.mxu0 0
        %334 = vmatprep.mubr.bf16.mxu0 0
        %335 = vmatmul.mubr.bf16.gmra.mrb[0].mxu0 %v300
        %v336 = vpop.f32.mrb[0].mxu0
        %v337 = vadd.f32 0.0, %v336
        %v338 = vpop.f32.mrb[0].mxu0
        %v339 = vpop.f32.mrb[0].mxu0
        %v340 = vpop.f32.mrb[0].mxu0
        %341 = vdwg.mxu0
        %v342 = vpack.c.bf16 %v337, %v337
        %344 = vrot.lane.b32.xlu0 %v342, 96
        %v345 = vpop.permute.xlu0 %344
        %vm346 = vcmask 64512
        %v348 = vsel %vm346, %v342, 0
        %v351 = vsel %vm346, %v345, 0
        %353 = vmatprep.subr.bf16.mxu0 0
        %354 = vmatpush1.bf16.xpose.msra.mxu0 %v351
        %355 = vmatprep.subr.bf16.mxu0 0
        %356 = vmatpush1.bf16.xpose.msra.mxu0 0
        %357 = vmatprep.subr.bf16.mxu0 0
        %358 = vmatpush1.bf16.xpose.msra.mxu0 0
        %359 = vmatprep.subr.bf16.mxu0 0
        %360 = vmatpush1.bf16.xpose.msra.mxu0 0
        %361 = vmatprep.subr.bf16.mxu0 0
        %362 = vmatpush1.bf16.xpose.msra.mxu0 0
        %363 = vmatprep.subr.bf16.mxu0 0
        %364 = vmatpush1.bf16.xpose.msra.mxu0 0
        %365 = vmatprep.subr.bf16.mxu0 0
        %366 = vmatpush1.bf16.xpose.msra.mxu0 0
        %367 = vmatprep.subr.bf16.mxu0 0
        %368 = vmatpush1.bf16.xpose.msra.mxu0 0
        %369 = vmatprep.subr.bf16.mxu0 0
        %370 = vmatpush1.bf16.xpose.msra.mxu0 0
        %371 = vmatprep.subr.bf16.mxu0 0
        %372 = vmatpush1.bf16.xpose.msra.mxu0 0
        %373 = vmatprep.subr.bf16.mxu0 0
        %374 = vmatpush1.bf16.xpose.msra.mxu0 0
        %375 = vmatprep.subr.bf16.mxu0 0
        %376 = vmatpush1.bf16.xpose.msra.mxu0 0
        %377 = vmatprep.subr.bf16.mxu0 0
        %378 = vmatpush1.bf16.xpose.msra.mxu0 0
        %379 = vmatprep.subr.bf16.mxu0 0
        %380 = vmatpush1.bf16.xpose.msra.mxu0 0
        %381 = vmatprep.subr.bf16.mxu0 0
        %382 = vmatpush1.bf16.xpose.msra.mxu0 0
        %383 = vmatprep.subr.bf16.mxu0 0
        %384 = vmatpush1.bf16.xpose.msra.mxu0 0
        %385 = vmatprep.mubr.bf16.mxu0 0
        %386 = vmatmul.mubr.bf16.gmra.mrb[0].mxu0 %v348
        %v387 = vpop.f32.mrb[0].mxu0
        %v388 = vadd.f32 0.0, %v387
        %v389 = vpop.f32.mrb[0].mxu0
        %v390 = vpop.f32.mrb[0].mxu0
        %v391 = vpop.f32.mrb[0].mxu0
        %392 = vdwg.mxu0
        %v393 = vsel %vm346, %v388, -inf
        %394 = vmax.xlane.f32.xlu0 %v393
        %v395 = vpop.xlane.xlu0 %394
        %v396 = vsub.f32 %v388, %v395
        %v397 = vmul.f32 %v396, 1.442695
        %v398 = vpow.pop %v397
        %v399 = vsel %vm346, %v398, 0.0
        %400 = vadd.xlane.f32.xlu0 %v399
        %v401 = vpop.xlane.xlu0 %400
        %v402 = vrcp.pop %v401
        %v403 = vmul.f32 %v398, %v402
        %404 = vst.msk [vmem:[%s279] sm:$0xff] %vm346, %v403
        %v405 = vpack.c.bf16 %v403, %v403
        %406 = vrot.lane.b32.xlu0 %v342, 64
        %v407 = vpop.permute.xlu0 %406
        %v409 = vsel %vm346, %v405, 0
        %vm411 = vcmask 1043456
        %v413 = vsel %vm411, %v407, 0
        %415 = vmatprep.subr.bf16.mxu0 0
        %416 = vmatpush1.bf16.msra.mxu0 %v413
        %417 = vmatprep.subr.bf16.mxu0 0
        %418 = vmatpush1.bf16.msra.mxu0 0
        %419 = vmatprep.subr.bf16.mxu0 0
        %420 = vmatpush1.bf16.msra.mxu0 0
        %421 = vmatprep.subr.bf16.mxu0 0
        %422 = vmatpush1.bf16.msra.mxu0 0
        %423 = vmatprep.subr.bf16.mxu0 0
        %424 = vmatpush1.bf16.msra.mxu0 0
        %425 = vmatprep.subr.bf16.mxu0 0
        %426 = vmatpush1.bf16.msra.mxu0 0
        %427 = vmatprep.subr.bf16.mxu0 0
        %428 = vmatpush1.bf16.msra.mxu0 0
        %429 = vmatprep.subr.bf16.mxu0 0
        %430 = vmatpush1.bf16.msra.mxu0 0
        %431 = vmatprep.subr.bf16.mxu0 0
        %432 = vmatpush1.bf16.msra.mxu0 0
        %433 = vmatprep.subr.bf16.mxu0 0
        %434 = vmatpush1.bf16.msra.mxu0 0
        %435 = vmatprep.subr.bf16.mxu0 0
        %436 = vmatpush1.bf16.msra.mxu0 0
        %437 = vmatprep.subr.bf16.mxu0 0
        %438 = vmatpush1.bf16.msra.mxu0 0
        %439 = vmatprep.subr.bf16.mxu0 0
        %440 = vmatpush1.bf16.msra.mxu0 0
        %441 = vmatprep.subr.bf16.mxu0 0
        %442 = vmatpush1.bf16.msra.mxu0 0
        %443 = vmatprep.subr.bf16.mxu0 0
        %444 = vmatpush1.bf16.msra.mxu0 0
        %445 = vmatprep.subr.bf16.mxu0 0
        %446 = vmatpush1.bf16.msra.mxu0 0
        %447 = vmatprep.mubr.bf16.mxu0 0
        %448 = vmatmul.mubr.bf16.gmra.mrb[0].mxu0 %v409
        %v449 = vpop.f32.mrb[0].mxu0
        %v450 = vadd.f32 0.0, %v449
        %v451 = vpop.f32.mrb[0].mxu0
        %v452 = vpop.f32.mrb[0].mxu0
        %v453 = vpop.f32.mrb[0].mxu0
        %454 = vdwg.mxu0
        %v455 = vpack.c.bf16 %v450, %v450
        %vm456 = vcmask 60416
        %457 = vst.msk [vmem:[#allocation2] sm:$0xf] %vm456, %v455
        %458 = vrot.lane.b32.xlu0 %v342, 120
        %v459 = vpop.permute.xlu0 %458
        %460 = vrot.lane.b32.xlu0 %v342, 88
        %v461 = vpop.permute.xlu0 %460
        %v463 = vsel %vm346, %v459, 0
        %v466 = vsel %vm346, %v461, 0
        %468 = vmatprep.subr.bf16.mxu0 0
        %469 = vmatpush1.bf16.xpose.msra.mxu0 %v466
        %470 = vmatprep.subr.bf16.mxu0 0
        %471 = vmatpush1.bf16.xpose.msra.mxu0 0
        %472 = vmatprep.subr.bf16.mxu0 0
        %473 = vmatpush1.bf16.xpose.msra.mxu0 0
        %474 = vmatprep.subr.bf16.mxu0 0
        %475 = vmatpush1.bf16.xpose.msra.mxu0 0
        %476 = vmatprep.subr.bf16.mxu0 0
        %477 = vmatpush1.bf16.xpose.msra.mxu0 0
        %478 = vmatprep.subr.bf16.mxu0 0
        %479 = vmatpush1.bf16.xpose.msra.mxu0 0
        %480 = vmatprep.subr.bf16.mxu0 0
        %481 = vmatpush1.bf16.xpose.msra.mxu0 0
        %482 = vmatprep.subr.bf16.mxu0 0
        %483 = vmatpush1.bf16.xpose.msra.mxu0 0
        %484 = vmatprep.subr.bf16.mxu0 0
        %485 = vmatpush1.bf16.xpose.msra.mxu0 0
        %486 = vmatprep.subr.bf16.mxu0 0
        %487 = vmatpush1.bf16.xpose.msra.mxu0 0
        %488 = vmatprep.subr.bf16.mxu0 0
        %489 = vmatpush1.bf16.xpose.msra.mxu0 0
        %490 = vmatprep.subr.bf16.mxu0 0
        %491 = vmatpush1.bf16.xpose.msra.mxu0 0
        %492 = vmatprep.subr.bf16.mxu0 0
        %493 = vmatpush1.bf16.xpose.msra.mxu0 0
        %494 = vmatprep.subr.bf16.mxu0 0
        %495 = vmatpush1.bf16.xpose.msra.mxu0 0
        %496 = vmatprep.subr.bf16.mxu0 0
        %497 = vmatpush1.bf16.xpose.msra.mxu0 0
        %498 = vmatprep.subr.bf16.mxu0 0
        %499 = vmatpush1.bf16.xpose.msra.mxu0 0
        %500 = vmatprep.mubr.bf16.mxu0 0
        %501 = vmatmul.mubr.bf16.gmra.mrb[0].mxu0 %v463
        %v502 = vpop.f32.mrb[0].mxu0
        %v503 = vadd.f32 0.0, %v502
        %v504 = vpop.f32.mrb[0].mxu0
        %v505 = vpop.f32.mrb[0].mxu0
        %v506 = vpop.f32.mrb[0].mxu0
        %507 = vdwg.mxu0
        %v508 = vsel %vm346, %v503, -inf
        %509 = vmax.xlane.f32.xlu0 %v508
        %v510 = vpop.xlane.xlu0 %509
        %v511 = vsub.f32 %v503, %v510
        %v512 = vmul.f32 %v511, 1.442695
        %v513 = vpow.pop %v512
        %v514 = vsel %vm346, %v513, 0.0
        %515 = vadd.xlane.f32.xlu0 %v514
        %v516 = vpop.xlane.xlu0 %515
        %v517 = vrcp.pop %v516
        %v518 = vmul.f32 %v513, %v517
        %s519 = scalar_lea.vmem %s279, 8 [#allocation10]
        %520 = vst.msk [vmem:[%s519] sm:$0xff] %vm346, %v518
        %v521 = vpack.c.bf16 %v518, %v518
        %522 = vrot.lane.b32.xlu0 %v342, 56
        %v523 = vpop.permute.xlu0 %522
        %v525 = vsel %vm346, %v521, 0
        %v528 = vsel %vm411, %v523, 0
        %530 = vmatprep.subr.bf16.mxu0 0
        %531 = vmatpush1.bf16.msra.mxu0 %v528
        %532 = vmatprep.subr.bf16.mxu0 0
        %533 = vmatpush1.bf16.msra.mxu0 0
        %534 = vmatprep.subr.bf16.mxu0 0
        %535 = vmatpush1.bf16.msra.mxu0 0
        %536 = vmatprep.subr.bf16.mxu0 0
        %537 = vmatpush1.bf16.msra.mxu0 0
        %538 = vmatprep.subr.bf16.mxu0 0
        %539 = vmatpush1.bf16.msra.mxu0 0
        %540 = vmatprep.subr.bf16.mxu0 0
        %541 = vmatpush1.bf16.msra.mxu0 0
        %542 = vmatprep.subr.bf16.mxu0 0
        %543 = vmatpush1.bf16.msra.mxu0 0
        %544 = vmatprep.subr.bf16.mxu0 0
        %545 = vmatpush1.bf16.msra.mxu0 0
        %546 = vmatprep.subr.bf16.mxu0 0
        %547 = vmatpush1.bf16.msra.mxu0 0
        %548 = vmatprep.subr.bf16.mxu0 0
        %549 = vmatpush1.bf16.msra.mxu0 0
        %550 = vmatprep.subr.bf16.mxu0 0
        %551 = vmatpush1.bf16.msra.mxu0 0
        %552 = vmatprep.subr.bf16.mxu0 0
        %553 = vmatpush1.bf16.msra.mxu0 0
        %554 = vmatprep.subr.bf16.mxu0 0
        %555 = vmatpush1.bf16.msra.mxu0 0
        %556 = vmatprep.subr.bf16.mxu0 0
        %557 = vmatpush1.bf16.msra.mxu0 0
        %558 = vmatprep.subr.bf16.mxu0 0
        %559 = vmatpush1.bf16.msra.mxu0 0
        %560 = vmatprep.subr.bf16.mxu0 0
        %561 = vmatpush1.bf16.msra.mxu0 0
        %562 = vmatprep.mubr.bf16.mxu0 0
        %563 = vmatmul.mubr.bf16.gmra.mrb[0].mxu0 %v525
        %v564 = vpop.f32.mrb[0].mxu0
        %v565 = vadd.f32 0.0, %v564
        %v566 = vpop.f32.mrb[0].mxu0
        %v567 = vpop.f32.mrb[0].mxu0
        %v568 = vpop.f32.mrb[0].mxu0
        %569 = vdwg.mxu0
        %v570 = vpack.c.bf16 %v565, %v565
        %v572 = vunpack.c.l.b16 %v570
        %v573 = vpack.c.b16 %v572, %v572
        %574 = vrot.lane.b32.xlu0 %v573, 8
        %v575 = vpop.permute.xlu0 %574
        %vm577 = vcmask 126016
        %578 = vst.msk [vmem:[#allocation2] sm:$0xf] %vm577, %v575
        %579 = vrot.lane.b32.xlu0 %v342, 112
        %v580 = vpop.permute.xlu0 %579
        %581 = vrot.lane.b32.xlu0 %v342, 80
        %v582 = vpop.permute.xlu0 %581
        %v584 = vsel %vm346, %v580, 0
        %v587 = vsel %vm346, %v582, 0
        %589 = vmatprep.subr.bf16.mxu0 0
        %590 = vmatpush1.bf16.xpose.msra.mxu0 %v587
        %591 = vmatprep.subr.bf16.mxu0 0
        %592 = vmatpush1.bf16.xpose.msra.mxu0 0
        %593 = vmatprep.subr.bf16.mxu0 0
        %594 = vmatpush1.bf16.xpose.msra.mxu0 0
        %595 = vmatprep.subr.bf16.mxu0 0
        %596 = vmatpush1.bf16.xpose.msra.mxu0 0
        %597 = vmatprep.subr.bf16.mxu0 0
        %598 = vmatpush1.bf16.xpose.msra.mxu0 0
        %599 = vmatprep.subr.bf16.mxu0 0
        %600 = vmatpush1.bf16.xpose.msra.mxu0 0
        %601 = vmatprep.subr.bf16.mxu0 0
        %602 = vmatpush1.bf16.xpose.msra.mxu0 0
        %603 = vmatprep.subr.bf16.mxu0 0
        %604 = vmatpush1.bf16.xpose.msra.mxu0 0
        %605 = vmatprep.subr.bf16.mxu0 0
        %606 = vmatpush1.bf16.xpose.msra.mxu0 0
        %607 = vmatprep.subr.bf16.mxu0 0
        %608 = vmatpush1.bf16.xpose.msra.mxu0 0
        %609 = vmatprep.subr.bf16.mxu0 0
        %610 = vmatpush1.bf16.xpose.msra.mxu0 0
        %611 = vmatprep.subr.bf16.mxu0 0
        %612 = vmatpush1.bf16.xpose.msra.mxu0 0
        %613 = vmatprep.subr.bf16.mxu0 0
        %614 = vmatpush1.bf16.xpose.msra.mxu0 0
        %615 = vmatprep.subr.bf16.mxu0 0
        %616 = vmatpush1.bf16.xpose.msra.mxu0 0
        %617 = vmatprep.subr.bf16.mxu0 0
        %618 = vmatpush1.bf16.xpose.msra.mxu0 0
        %619 = vmatprep.subr.bf16.mxu0 0
        %620 = vmatpush1.bf16.xpose.msra.mxu0 0
        %621 = vmatprep.mubr.bf16.mxu0 0
        %622 = vmatmul.mubr.bf16.gmra.mrb[0].mxu0 %v584
        %v623 = vpop.f32.mrb[0].mxu0
        %v624 = vadd.f32 0.0, %v623
        %v625 = vpop.f32.mrb[0].mxu0
        %v626 = vpop.f32.mrb[0].mxu0
        %v627 = vpop.f32.mrb[0].mxu0
        %628 = vdwg.mxu0
        %v629 = vsel %vm346, %v624, -inf
        %630 = vmax.xlane.f32.xlu0 %v629
        %v631 = vpop.xlane.xlu0 %630
        %v632 = vsub.f32 %v624, %v631
        %v633 = vmul.f32 %v632, 1.442695
        %v634 = vpow.pop %v633
        %v635 = vsel %vm346, %v634, 0.0
        %636 = vadd.xlane.f32.xlu0 %v635
        %v637 = vpop.xlane.xlu0 %636
        %v638 = vrcp.pop %v637
        %v639 = vmul.f32 %v634, %v638
        %s640 = scalar_lea.vmem %s279, 16 [#allocation10]
        %641 = vst.msk [vmem:[%s640] sm:$0xff] %vm346, %v639
        %v642 = vpack.c.bf16 %v639, %v639
        %643 = vrot.lane.b32.xlu0 %v342, 48
        %v644 = vpop.permute.xlu0 %643
        %v646 = vsel %vm346, %v642, 0
        %v649 = vsel %vm411, %v644, 0
        %651 = vmatprep.subr.bf16.mxu0 0
        %652 = vmatpush1.bf16.msra.mxu0 %v649
        %653 = vmatprep.subr.bf16.mxu0 0
        %654 = vmatpush1.bf16.msra.mxu0 0
        %655 = vmatprep.subr.bf16.mxu0 0
        %656 = vmatpush1.bf16.msra.mxu0 0
        %657 = vmatprep.subr.bf16.mxu0 0
        %658 = vmatpush1.bf16.msra.mxu0 0
        %659 = vmatprep.subr.bf16.mxu0 0
        %660 = vmatpush1.bf16.msra.mxu0 0
        %661 = vmatprep.subr.bf16.mxu0 0
        %662 = vmatpush1.bf16.msra.mxu0 0
        %663 = vmatprep.subr.bf16.mxu0 0
        %664 = vmatpush1.bf16.msra.mxu0 0
        %665 = vmatprep.subr.bf16.mxu0 0
        %666 = vmatpush1.bf16.msra.mxu0 0
        %667 = vmatprep.subr.bf16.mxu0 0
        %668 = vmatpush1.bf16.msra.mxu0 0
        %669 = vmatprep.subr.bf16.mxu0 0
        %670 = vmatpush1.bf16.msra.mxu0 0
        %671 = vmatprep.subr.bf16.mxu0 0
        %672 = vmatpush1.bf16.msra.mxu0 0
        %673 = vmatprep.subr.bf16.mxu0 0
        %674 = vmatpush1.bf16.msra.mxu0 0
        %675 = vmatprep.subr.bf16.mxu0 0
        %676 = vmatpush1.bf16.msra.mxu0 0
        %677 = vmatprep.subr.bf16.mxu0 0
        %678 = vmatpush1.bf16.msra.mxu0 0
        %679 = vmatprep.subr.bf16.mxu0 0
        %680 = vmatpush1.bf16.msra.mxu0 0
        %681 = vmatprep.subr.bf16.mxu0 0
        %682 = vmatpush1.bf16.msra.mxu0 0
        %683 = vmatprep.mubr.bf16.mxu0 0
        %684 = vmatmul.mubr.bf16.gmra.mrb[0].mxu0 %v646
        %v685 = vpop.f32.mrb[0].mxu0
        %v686 = vadd.f32 0.0, %v685
        %v687 = vpop.f32.mrb[0].mxu0
        %v688 = vpop.f32.mrb[0].mxu0
        %v689 = vpop.f32.mrb[0].mxu0
        %690 = vdwg.mxu0
        %v691 = vpack.c.bf16 %v686, %v686
        %v693 = vunpack.c.l.b16 %v691
        %v694 = vpack.c.b16 %v693, %v693
        %695 = vrot.lane.b32.xlu0 %v694, 16
        %v696 = vpop.permute.xlu0 %695
        %vm698 = vcmask 191616
        %699 = vst.msk [vmem:[#allocation2] sm:$0xf] %vm698, %v696
        %700 = vrot.lane.b32.xlu0 %v342, 104
        %v701 = vpop.permute.xlu0 %700
        %702 = vrot.lane.b32.xlu0 %v342, 72
        %v703 = vpop.permute.xlu0 %702
        %v705 = vsel %vm346, %v701, 0
        %v708 = vsel %vm346, %v703, 0
        %710 = vmatprep.subr.bf16.mxu0 0
        %711 = vmatpush1.bf16.xpose.msra.mxu0 %v708
        %712 = vmatprep.subr.bf16.mxu0 0
        %713 = vmatpush1.bf16.xpose.msra.mxu0 0
        %714 = vmatprep.subr.bf16.mxu0 0
        %715 = vmatpush1.bf16.xpose.msra.mxu0 0
        %716 = vmatprep.subr.bf16.mxu0 0
        %717 = vmatpush1.bf16.xpose.msra.mxu0 0
        %718 = vmatprep.subr.bf16.mxu0 0
        %719 = vmatpush1.bf16.xpose.msra.mxu0 0
        %720 = vmatprep.subr.bf16.mxu0 0
        %721 = vmatpush1.bf16.xpose.msra.mxu0 0
        %722 = vmatprep.subr.bf16.mxu0 0
        %723 = vmatpush1.bf16.xpose.msra.mxu0 0
        %724 = vmatprep.subr.bf16.mxu0 0
        %725 = vmatpush1.bf16.xpose.msra.mxu0 0
        %726 = vmatprep.subr.bf16.mxu0 0
        %727 = vmatpush1.bf16.xpose.msra.mxu0 0
        %728 = vmatprep.subr.bf16.mxu0 0
        %729 = vmatpush1.bf16.xpose.msra.mxu0 0
        %730 = vmatprep.subr.bf16.mxu0 0
        %731 = vmatpush1.bf16.xpose.msra.mxu0 0
        %732 = vmatprep.subr.bf16.mxu0 0
        %733 = vmatpush1.bf16.xpose.msra.mxu0 0
        %734 = vmatprep.subr.bf16.mxu0 0
        %735 = vmatpush1.bf16.xpose.msra.mxu0 0
        %736 = vmatprep.subr.bf16.mxu0 0
        %737 = vmatpush1.bf16.xpose.msra.mxu0 0
        %738 = vmatprep.subr.bf16.mxu0 0
        %739 = vmatpush1.bf16.xpose.msra.mxu0 0
        %740 = vmatprep.subr.bf16.mxu0 0
        %741 = vmatpush1.bf16.xpose.msra.mxu0 0
        %742 = vmatprep.mubr.bf16.mxu0 0
        %743 = vmatmul.mubr.bf16.gmra.mrb[0].mxu0 %v705
        %v744 = vpop.f32.mrb[0].mxu0
        %v745 = vadd.f32 0.0, %v744
        %v746 = vpop.f32.mrb[0].mxu0
        %v747 = vpop.f32.mrb[0].mxu0
        %v748 = vpop.f32.mrb[0].mxu0
        %749 = vdwg.mxu0
        %v750 = vsel %vm346, %v745, -inf
        %751 = vmax.xlane.f32.xlu0 %v750
        %v752 = vpop.xlane.xlu0 %751
        %v753 = vsub.f32 %v745, %v752
        %v754 = vmul.f32 %v753, 1.442695
        %v755 = vpow.pop %v754
        %v756 = vsel %vm346, %v755, 0.0
        %757 = vadd.xlane.f32.xlu0 %v756
        %v758 = vpop.xlane.xlu0 %757
        %v759 = vrcp.pop %v758
        %v760 = vmul.f32 %v755, %v759
        %s761 = scalar_lea.vmem %s279, 24 [#allocation10]
        %762 = vst.msk [vmem:[%s761] sm:$0xff] %vm346, %v760
        %v763 = vpack.c.bf16 %v760, %v760
        %764 = vrot.lane.b32.xlu0 %v342, 40
        %v765 = vpop.permute.xlu0 %764
        %v767 = vsel %vm346, %v763, 0
        %v770 = vsel %vm411, %v765, 0
        %772 = vmatprep.subr.bf16.mxu0 0
        %773 = vmatpush1.bf16.msra.mxu0 %v770
        %774 = vmatprep.subr.bf16.mxu0 0
        %775 = vmatpush1.bf16.msra.mxu0 0
        %776 = vmatprep.subr.bf16.mxu0 0
        %777 = vmatpush1.bf16.msra.mxu0 0
        %778 = vmatprep.subr.bf16.mxu0 0
        %779 = vmatpush1.bf16.msra.mxu0 0
        %780 = vmatprep.subr.bf16.mxu0 0
        %781 = vmatpush1.bf16.msra.mxu0 0
        %782 = vmatprep.subr.bf16.mxu0 0
        %783 = vmatpush1.bf16.msra.mxu0 0
        %784 = vmatprep.subr.bf16.mxu0 0
        %785 = vmatpush1.bf16.msra.mxu0 0
        %786 = vmatprep.subr.bf16.mxu0 0
        %787 = vmatpush1.bf16.msra.mxu0 0
        %788 = vmatprep.subr.bf16.mxu0 0
        %789 = vmatpush1.bf16.msra.mxu0 0
        %790 = vmatprep.subr.bf16.mxu0 0
        %791 = vmatpush1.bf16.msra.mxu0 0
        %792 = vmatprep.subr.bf16.mxu0 0
        %793 = vmatpush1.bf16.msra.mxu0 0
        %794 = vmatprep.subr.bf16.mxu0 0
        %795 = vmatpush1.bf16.msra.mxu0 0
        %796 = vmatprep.subr.bf16.mxu0 0
        %797 = vmatpush1.bf16.msra.mxu0 0
        %798 = vmatprep.subr.bf16.mxu0 0
        %799 = vmatpush1.bf16.msra.mxu0 0
        %800 = vmatprep.subr.bf16.mxu0 0
        %801 = vmatpush1.bf16.msra.mxu0 0
        %802 = vmatprep.subr.bf16.mxu0 0
        %803 = vmatpush1.bf16.msra.mxu0 0
        %804 = vmatprep.mubr.bf16.mxu0 0
        %805 = vmatmul.mubr.bf16.gmra.mrb[0].mxu0 %v767
        %v806 = vpop.f32.mrb[0].mxu0
        %v807 = vadd.f32 0.0, %v806
        %v808 = vpop.f32.mrb[0].mxu0
        %v809 = vpop.f32.mrb[0].mxu0
        %v810 = vpop.f32.mrb[0].mxu0
        %811 = vdwg.mxu0
        %v812 = vpack.c.bf16 %v807, %v807
        %v814 = vunpack.c.l.b16 %v812
        %v815 = vpack.c.b16 %v814, %v814
        %816 = vrot.lane.b32.xlu0 %v815, 24
        %v817 = vpop.permute.xlu0 %816
        %vm819 = vcmask 257216
        %820 = vst.msk [vmem:[#allocation2] sm:$0xf] %vm819, %v817
        %v821 = vld [vmem:[#allocation2] sm:$0xf]
        %v822 = vld [vmem:[#allocation8] sm:$0xf]
        %v823 = vld [vmem:[#allocation8 + $0x4] sm:$0xf]
        %v824 = vld [vmem:[#allocation8 + $0x8] sm:$0xf]
        %v825 = vld [vmem:[#allocation8 + $0xc] sm:$0xf]
        %v826 = vld [vmem:[%s3] sm:$0x1]
        %v828 = vlaneseq
        %v829 = vshrl.u32 %v828, 7
        %v830 = vsub.s32 0, %v829
        %v831 = vrot.slane %v826, %v830
        %v837 = vunpack.c.l.b16 %v822
        %v838 = vunpack.c.l.b16 %v823
        %v839 = vunpack.c.l.b16 %v824
        %v840 = vunpack.c.l.b16 %v825
        %v841 = vpack.c.b16 %v838, %v837
        %v842 = vpack.c.b16 %v840, %v839
        %v846 = vsel %vm298, %v821, 0
        %848 = vmatprep.subr.bf16.mxu0 0
        %849 = vmatpush1.bf16.msra.mxu0 %v841
        %850 = vmatprep.subr.bf16.mxu0 0
        %851 = vmatpush1.bf16.msra.mxu0 %v842
        %852 = vmatprep.subr.bf16.mxu0 0
        %853 = vmatpush1.bf16.msra.mxu0 0
        %854 = vmatprep.subr.bf16.mxu0 0
        %855 = vmatpush1.bf16.msra.mxu0 0
        %856 = vmatprep.subr.bf16.mxu0 0
        %857 = vmatpush1.bf16.msra.mxu0 0
        %858 = vmatprep.subr.bf16.mxu0 0
        %859 = vmatpush1.bf16.msra.mxu0 0
        %860 = vmatprep.subr.bf16.mxu0 0
        %861 = vmatpush1.bf16.msra.mxu0 0
        %862 = vmatprep.subr.bf16.mxu0 0
        %863 = vmatpush1.bf16.msra.mxu0 0
        %864 = vmatprep.subr.bf16.mxu0 0
        %865 = vmatpush1.bf16.msra.mxu0 0
        %866 = vmatprep.subr.bf16.mxu0 0
        %867 = vmatpush1.bf16.msra.mxu0 0
        %868 = vmatprep.subr.bf16.mxu0 0
        %869 = vmatpush1.bf16.msra.mxu0 0
        %870 = vmatprep.subr.bf16.mxu0 0
        %871 = vmatpush1.bf16.msra.mxu0 0
        %872 = vmatprep.subr.bf16.mxu0 0
        %873 = vmatpush1.bf16.msra.mxu0 0
        %874 = vmatprep.subr.bf16.mxu0 0
        %875 = vmatpush1.bf16.msra.mxu0 0
        %876 = vmatprep.subr.bf16.mxu0 0
        %877 = vmatpush1.bf16.msra.mxu0 0
        %878 = vmatprep.subr.bf16.mxu0 0
        %879 = vmatpush1.bf16.msra.mxu0 0
        %880 = vmatprep.mubr.bf16.mxu0 0
        %881 = vmatmul.mubr.bf16.gmra.mrb[0].mxu0 %v846
        %v882 = vpop.f32.mrb[0].mxu0
        %v883 = vadd.f32 %v831, %v882
        %v884 = vpop.f32.mrb[0].mxu0
        %v885 = vpop.f32.mrb[0].mxu0
        %v886 = vpop.f32.mrb[0].mxu0
        %887 = vdwg.mxu0
        %888 = vst.msk [vmem:[%s272] sm:$0xff] %vm298, %v883
        %s889 = sand.u32 %s124, 1
        %s890 = scalar_lea.sflag [#allocation5], %s889
        %s891 = sand.u32 %s124, 1
        %s892 = smul.addr %s891, 8
        %s893 = scalar_lea.vmem [#allocation9], %s892
        %s894 = sand.u32 %s150, 1
        %s895 = scalar_lea.sflag [#allocation11], %s894
        %s896 = sand.u32 %s150, 1
        %s897 = smul.addr %s896, 32
        %s898 = scalar_lea.vmem [#allocation10], %s897
        // Predicated region
        $region49: #{tpu_custom_call.1} parent=35 // pred_check
          %p899 = pneg %p134
        $region50: #{tpu_custom_call.1} parent=35 // pred_check_branch
          %901 = sbr.rel (%p899) target = $region52
        $region51: #{tpu_custom_call.1} parent=35 // pred_region
          %s903 = ssub.s32 128, 128
          %904 = vsyncadd %s890, %s903
          %s905 = smul.addr %s27, 128
          %s906 = scalar_lea.hbm %s4, %s905
          %s908 = sshll.u32 %s893, 4
          %s909 = int_to_ptr.vmem [resolvable:$true] %s908
          %911 = dma.vmem_to_hbm [thread:$0]  %s909, 128, %s906, %s890
        $region52: #{tpu_custom_call.1} parent=35 // pred_fallthru
          _
        // Predicated region
        $region53: #{tpu_custom_call.1} parent=35 // pred_check
          %p912 = pneg %p160
        $region54: #{tpu_custom_call.1} parent=35 // pred_check_branch
          %914 = sbr.rel (%p912) target = $region56
        $region55: #{tpu_custom_call.1} parent=35 // pred_region
          %s916 = ssub.s32 512, 512
          %917 = vsyncadd %s895, %s916
          %s918 = smul.addr %s27, 128
          %s919 = scalar_lea.hbm %s5, %s918
          %s920 = sshll.u32 %s898, 4
          %s921 = int_to_ptr.vmem [resolvable:$true] %s920
          %926 = dma.vmem_to_hbm [thread:$0]  %s921, 512, %s919, %s895, 128, 256, 8
        $region56: #{tpu_custom_call.1} parent=35 // pred_fallthru
          _
      $region36: #{tpu_custom_call.1} parent=5 // pred_fallthru
        _
      %p927 = scmp.le.s32.totalorder 2, %s22
      // Predicated region
      $region57: #{tpu_custom_call.1} parent=5 // pred_check
        %p928 = pneg %p927
      $region58: #{tpu_custom_call.1} parent=5 // pred_check_branch
        %930 = sbr.rel (%p928) target = $region60
      $region59: #{tpu_custom_call.1} parent=5 // pred_region
        %s931 = ssub.s32 %s22, 2
        // Predicated region
        $region61: #{tpu_custom_call.1} parent=59 // pred_check
          %p932 = pneg %p140
        $region62: #{tpu_custom_call.1} parent=59 // pred_check_branch
          %934 = sbr.rel (%p932) target = $region64
        $region63: #{tpu_custom_call.1} parent=59 // pred_region
          %s935 = sand.u32 %s125, 1
          %s936 = scalar_lea.sflag [#allocation5], %s935
          %s937 = sand.u32 %s125, 1
          %s938 = smul.addr %s937, 8
          %s939 = scalar_lea.vmem [#allocation9], %s938
          %940 = dma.done %s936, 128
        $region64: #{tpu_custom_call.1} parent=59 // pred_fallthru
          _
        // Predicated region
        $region65: #{tpu_custom_call.1} parent=59 // pred_check
          %p941 = pneg %p166
        $region66: #{tpu_custom_call.1} parent=59 // pred_check_branch
          %943 = sbr.rel (%p941) target = $region68
        $region67: #{tpu_custom_call.1} parent=59 // pred_region
          %s944 = sand.u32 %s151, 1
          %s945 = scalar_lea.sflag [#allocation11], %s944
          %s946 = sand.u32 %s151, 1
          %s947 = smul.addr %s946, 32
          %s948 = scalar_lea.vmem [#allocation10], %s947
          %949 = dma.done %s945, 512
        $region68: #{tpu_custom_call.1} parent=59 // pred_fallthru
          _
      $region60: #{tpu_custom_call.1} parent=5 // pred_fallthru
        _
    $region6: #{tpu_custom_call.1} parent=1 // loop_footer
      %s26 = sadd.s32 1, %s22
    $region7: #{tpu_custom_call.1} parent=1 // loop_footer_branch
      %21 = sbr.rel target = $region3
    $region8: #{tpu_custom_call.1} parent=1 // loop_exit
      _
    %950 = vsyncpa [#allocation4], 1
    %s951 = scalar_lea.sflag [#allocation4], 1
    %952 = vsyncpa %s951, 1
    %953 = vsyncpa [#allocation7], 1
    %954 = vsyncpa [#allocation5], 1
    %s955 = scalar_lea.sflag [#allocation5], 1
    %956 = vsyncpa %s955, 1
    %957 = vsyncpa [#allocation11], 1
    %s958 = scalar_lea.sflag [#allocation11], 1
    %959 = vsyncpa %s958, 1

</llo_original>
